<compile_context>
chip_gen: v7x
topology: tpu7x:2x2x1
jax: 0.10.0
libtpu: 0.0.40
codegen_flags: <defaults>
</compile_context>

<pallas_src>
import functools

import jax
import jax.numpy as jnp
from jax.experimental import pallas as pl
from jax.experimental.pallas import tpu as pltpu

_HALO = 128  # width of the halo strips (one 128-lane block)


def basic_block_kernel(xl_ref, xm_ref, xr_ref, w1_ref, s1_ref, b1_ref,
                       w2_ref, s2_ref, b2_ref, o_ref, *, l_valid, l_tile):
    """One (batch, length-tile) grid step. Layout is NCL (length on lanes).

    xl_ref : (Cin, 128)     the 128 columns just before this tile (left halo)
    xm_ref : (Cin, T)       this tile's input columns (also the residual)
    xr_ref : (Cin, 128)     the 128 columns just after this tile (right halo)
    w1_ref : (Cout, 3*Cin)  conv1 taps, im2col row order k*Cin + c, bf16
    w2_ref : (Cout, 3*Cout) conv2 taps, bf16
    s*/b*  : (Cout, 1)      folded BatchNorm scale / shift, f32
    o_ref  : (Cout, T)
    """
    T = l_tile
    lt = pl.program_id(1)

    xm = xm_ref[...]                                    # f32; reused as residual
    xm_b = xm.astype(jnp.bfloat16)
    left = xl_ref[...][:, _HALO - 2:_HALO].astype(jnp.bfloat16)   # (Cin, 2)
    right = xr_ref[...][:, 0:2].astype(jnp.bfloat16)              # (Cin, 2)
    # x over original columns [lt*T - 2, (lt+1)*T + 2)  (zeros outside data)
    x_ext = jnp.concatenate([left, xm_b, right], axis=1)          # (Cin, T+4)

    # ---- conv1: fold the 3 taps into one MXU matmul (K = 3*Cin) ----
    x_cols = jnp.concatenate(
        [x_ext[:, 0:T + 2], x_ext[:, 1:T + 3], x_ext[:, 2:T + 4]],
        axis=0)                                                   # (3Cin, T+2) bf16
    h = jnp.dot(w1_ref[...], x_cols, preferred_element_type=jnp.float32)
    h = h * s1_ref[...] + b1_ref[...]               # folded BN1
    h = jnp.maximum(h, 0.0)                         # ReLU

    # conv2's own zero padding: h must be exactly 0 outside the valid length.
    col = jax.lax.broadcasted_iota(jnp.int32, (1, T + 2), 1)
    j = lt * T - 1 + col                            # original column of each h col
    h = jnp.where((j >= 0) & (j < l_valid), h, 0.0).astype(jnp.bfloat16)

    # ---- conv2: same single-matmul im2col trick ----
    h_cols = jnp.concatenate(
        [h[:, 0:T], h[:, 1:T + 1], h[:, 2:T + 2]], axis=0)        # (3Cout, T) bf16
    o = jnp.dot(w2_ref[...], h_cols, preferred_element_type=jnp.float32)
    o = o * s2_ref[...] + b2_ref[...]               # folded BN2
    o = o + xm                                      # residual (downsample=None)
    o_ref[...] = jnp.maximum(o, 0.0).astype(o_ref.dtype)


def basic_block_forward(x_ncl, params, *, l_tile=None):
    """x_ncl: (N, Cin, L) float32, PyTorch NCL layout. Returns (N, Cout, L)."""
    N, Cin, L = x_ncl.shape
    Cout = params["conv1_w"].shape[0]
    assert Cout == Cin, "downsample=None requires inplanes == planes"
    # TODO(synk): stride>1 / downsample BasicBlock variant not implemented.

    # Length tile: multiple of 128 (lane-dense stores). Large tiles amortize
    # the ~0.35us per-grid-step overhead; capped at 512 so the per-step
    # working set stays well under v7x's 64 MiB VMEM.
    if l_tile is None:
        l_tile = min(512, ((L + 127) // 128) * 128)
    T = l_tile
    assert T % 128 == 0
    ntiles = pl.cdiv(L, T)
    lout = ntiles * T

    # Zero-pad the length axis once: T leading zeros (left halo of tile 0 and
    # keeps tile offsets on block boundaries) plus trailing zeros so the last
    # tile's right-halo strip stays in bounds. The zeros also implement
    # Conv1d's padding=1 for x. (In a stacked-block model this padded NCL
    # buffer would be kept across blocks instead of re-materialized.)
    lp = (ntiles + 1) * T + _HALO
    xp = jnp.pad(x_ncl, ((0, 0), (0, 0), (T, lp - T - L)))

    # Fold BatchNorm1d (inference) into per-channel scale/shift, shape (C,1).
    def fold_bn(gamma, beta, mean, var, eps=1e-5):
        scale = gamma / jnp.sqrt(var + eps)
        shift = beta - mean * scale
        return scale.reshape(-1, 1), shift.reshape(-1, 1)

    s1, b1 = fold_bn(params["bn1_gamma"], params["bn1_beta"],
                     params["bn1_mean"], params["bn1_var"])
    s2, b2 = fold_bn(params["bn2_gamma"], params["bn2_beta"],
                     params["bn2_mean"], params["bn2_var"])

    # Conv weights (Cout, Cin, 3) -> (Cout, 3*Cin) with rows ordered
    # k*Cin + c to match the in-kernel im2col. bf16 operands feed the MXU at
    # full rate; accumulation stays f32 in the kernel.
    w1 = jnp.transpose(params["conv1_w"], (0, 2, 1)).reshape(Cout, 3 * Cin)
    w2 = jnp.transpose(params["conv2_w"], (0, 2, 1)).reshape(Cout, 3 * Cout)
    w1 = w1.astype(jnp.bfloat16)
    w2 = w2.astype(jnp.bfloat16)

    kernel = functools.partial(basic_block_kernel, l_valid=L, l_tile=T)
    bpt = T // _HALO  # 128-wide blocks per length tile

    flops = 2 * N * L * Cout * 3 * Cin + 2 * N * L * Cout * 3 * Cout
    bytes_accessed = (xp.size * 4 + N * Cout * lout * 4
                      + w1.size * 2 + w2.size * 2 + 4 * Cout * 4)

    out_p = pl.pallas_call(
        kernel,
        out_shape=jax.ShapeDtypeStruct((N, Cout, lout), jnp.float32),
        grid=(N, ntiles),
        in_specs=[
            # left halo strip: the 128 columns ending where this tile starts
            pl.BlockSpec((None, Cin, _HALO),
                         lambda n, lt: (n, 0, (lt + 1) * bpt - 1)),
            # main tile (original columns [lt*T, (lt+1)*T))
            pl.BlockSpec((None, Cin, T), lambda n, lt: (n, 0, lt + 1)),
            # right halo strip: the 128 columns starting where the next tile starts
            pl.BlockSpec((None, Cin, _HALO),
                         lambda n, lt: (n, 0, (lt + 2) * bpt)),
            pl.BlockSpec((Cout, 3 * Cin), lambda n, lt: (0, 0)),
            pl.BlockSpec((Cout, 1), lambda n, lt: (0, 0)),
            pl.BlockSpec((Cout, 1), lambda n, lt: (0, 0)),
            pl.BlockSpec((Cout, 3 * Cout), lambda n, lt: (0, 0)),
            pl.BlockSpec((Cout, 1), lambda n, lt: (0, 0)),
            pl.BlockSpec((Cout, 1), lambda n, lt: (0, 0)),
        ],
        out_specs=pl.BlockSpec((None, Cout, T), lambda n, lt: (n, 0, lt)),
        compiler_params=pltpu.CompilerParams(
            dimension_semantics=("parallel", "parallel"),
            vmem_limit_bytes=32 * 1024 * 1024),
        cost_estimate=pl.CostEstimate(flops=flops, transcendentals=0,
                                      bytes_accessed=bytes_accessed),
    )(xp, xp, xp, w1, s1, b1, w2, s2, b2)

    return out_p[:, :, :L] if lout != L else out_p


def reference_forward(x, params, eps=1e-5):
    """Pure-JAX f32 reference of the PyTorch BasicBlock (inference BN)."""
    def conv(h, w):
        return jax.lax.conv_general_dilated(
            h, w, window_strides=(1,), padding=((1, 1),),
            dimension_numbers=("NCH", "OIH", "NCH"))

    def bn(h, g, b, m, v):
        s = g / jnp.sqrt(v + eps)
        return h * s[None, :, None] + (b - m * s)[None, :, None]

    h = conv(x, params["conv1_w"])
    h = jnp.maximum(bn(h, params["bn1_gamma"], params["bn1_beta"],
                       params["bn1_mean"], params["bn1_var"]), 0.0)
    o = conv(h, params["conv2_w"])
    o = bn(o, params["bn2_gamma"], params["bn2_beta"],
           params["bn2_mean"], params["bn2_var"])
    return jnp.maximum(o + x, 0.0)


def init_params(key, inplanes, planes):
    ks = jax.random.split(key, 4)
    # TODO(synk): training-mode BatchNorm (batch statistics) not implemented;
    # inference-mode BN with deterministic running stats is used instead.
    return {
        "conv1_w": 0.1 * jax.random.normal(ks[0], (planes, inplanes, 3), jnp.float32),
        "conv2_w": 0.1 * jax.random.normal(ks[1], (planes, planes, 3), jnp.float32),
        "bn1_gamma": jnp.ones((planes,), jnp.float32),
        "bn1_beta": jnp.zeros((planes,), jnp.float32),
        "bn1_mean": 0.05 * jax.random.normal(ks[2], (planes,), jnp.float32),
        "bn1_var": jnp.ones((planes,), jnp.float32),
        "bn2_gamma": jnp.ones((planes,), jnp.float32),
        "bn2_beta": jnp.zeros((planes,), jnp.float32),
        "bn2_mean": 0.05 * jax.random.normal(ks[3], (planes,), jnp.float32),
        "bn2_var": jnp.ones((planes,), jnp.float32),
    }


if __name__ == "__main__":
    key = jax.random.PRNGKey(0)
    k_x, k_p = jax.random.split(key)

    N, C, L = 2, 8, 16          # inplanes == planes (downsample is None)
    x = jax.random.normal(k_x, (N, C, L), jnp.float32)
    params = init_params(k_p, C, C)

    out = basic_block_forward(x, params)
    jax.block_until_ready(out)
    assert out.shape == (N, C, L)

    ref = reference_forward(x, params)
    err = float(jnp.max(jnp.abs(out - ref)))
    assert err < 5e-2, f"max abs error {err}"
    print("KERNEL_OK")
</pallas_src>

<mosaic_0001>
module attributes {stable_mosaic.version = 11 : i64} {
  func.func @basic_block_kernel(%arg0: i32, %arg1: i32, %arg2: memref<1x8x128xf32, #tpu.memory_space<vmem>>, %arg3: memref<1x8x128xf32, #tpu.memory_space<vmem>>, %arg4: memref<1x8x128xf32, #tpu.memory_space<vmem>>, %arg5: memref<8x24xbf16, #tpu.memory_space<vmem>>, %arg6: memref<8x1xf32, #tpu.memory_space<vmem>>, %arg7: memref<8x1xf32, #tpu.memory_space<vmem>>, %arg8: memref<8x24xbf16, #tpu.memory_space<vmem>>, %arg9: memref<8x1xf32, #tpu.memory_space<vmem>>, %arg10: memref<8x1xf32, #tpu.memory_space<vmem>>, %arg11: memref<1x8x128xf32, #tpu.memory_space<vmem>>) attributes {dimension_semantics = [#tpu.dimension_semantics<parallel>, #tpu.dimension_semantics<parallel>], iteration_bounds = array<i64: 2, 1>, scalar_prefetch = 0 : i64, scratch_operands = 0 : i64, tpu.core_type = #tpu.core_type<tc>, window_params = [{transform_indices = @transform_0, window_bounds = array<i64: 1, 8, 128>}, {transform_indices = @transform_1, window_bounds = array<i64: 1, 8, 128>}, {transform_indices = @transform_2, window_bounds = array<i64: 1, 8, 128>}, {pipeline_mode = #tpu.pipeline_mode<synchronous>, transform_indices = @transform_3, window_bounds = array<i64: 8, 24>}, {pipeline_mode = #tpu.pipeline_mode<synchronous>, transform_indices = @transform_4, window_bounds = array<i64: 8, 1>}, {pipeline_mode = #tpu.pipeline_mode<synchronous>, transform_indices = @transform_5, window_bounds = array<i64: 8, 1>}, {pipeline_mode = #tpu.pipeline_mode<synchronous>, transform_indices = @transform_6, window_bounds = array<i64: 8, 24>}, {pipeline_mode = #tpu.pipeline_mode<synchronous>, transform_indices = @transform_7, window_bounds = array<i64: 8, 1>}, {pipeline_mode = #tpu.pipeline_mode<synchronous>, transform_indices = @transform_8, window_bounds = array<i64: 8, 1>}, {transform_indices = @transform_9, window_bounds = array<i64: 1, 8, 128>}]} {
    %c0 = arith.constant 0 : index
    %c0_0 = arith.constant 0 : index
    %c0_1 = arith.constant 0 : index
    %0 = vector.load %arg3[%c0, %c0_0, %c0_1] : memref<1x8x128xf32, #tpu.memory_space<vmem>>, vector<1x8x128xf32>
    %1 = vector.shape_cast %0 : vector<1x8x128xf32> to vector<8x128xf32>
    %2 = arith.truncf %1 : vector<8x128xf32> to vector<8x128xbf16>
    %c0_2 = arith.constant 0 : index
    %c0_3 = arith.constant 0 : index
    %c0_4 = arith.constant 0 : index
    %3 = vector.load %arg2[%c0_2, %c0_3, %c0_4] : memref<1x8x128xf32, #tpu.memory_space<vmem>>, vector<1x8x128xf32>
    %4 = vector.shape_cast %3 : vector<1x8x128xf32> to vector<8x128xf32>
    %5 = vector.extract_strided_slice %4 {offsets = [0, 126], sizes = [8, 2], strides = [1, 1]} : vector<8x128xf32> to vector<8x2xf32>
    %6 = arith.truncf %5 : vector<8x2xf32> to vector<8x2xbf16>
    %c0_5 = arith.constant 0 : index
    %c0_6 = arith.constant 0 : index
    %c0_7 = arith.constant 0 : index
    %7 = vector.load %arg4[%c0_5, %c0_6, %c0_7] : memref<1x8x128xf32, #tpu.memory_space<vmem>>, vector<1x8x128xf32>
    %8 = vector.shape_cast %7 : vector<1x8x128xf32> to vector<8x128xf32>
    %9 = vector.extract_strided_slice %8 {offsets = [0, 0], sizes = [8, 2], strides = [1, 1]} : vector<8x128xf32> to vector<8x2xf32>
    %10 = arith.truncf %9 : vector<8x2xf32> to vector<8x2xbf16>
    %11 = tpu.concatenate %6, %2, %10 in 1 : vector<8x2xbf16>, vector<8x128xbf16>, vector<8x2xbf16> -> vector<8x132xbf16>
    %12 = vector.extract_strided_slice %11 {offsets = [0, 0], sizes = [8, 130], strides = [1, 1]} : vector<8x132xbf16> to vector<8x130xbf16>
    %13 = vector.extract_strided_slice %11 {offsets = [0, 1], sizes = [8, 130], strides = [1, 1]} : vector<8x132xbf16> to vector<8x130xbf16>
    %14 = vector.extract_strided_slice %11 {offsets = [0, 2], sizes = [8, 130], strides = [1, 1]} : vector<8x132xbf16> to vector<8x130xbf16>
    %15 = tpu.concatenate %12, %13, %14 in 0 : vector<8x130xbf16>, vector<8x130xbf16>, vector<8x130xbf16> -> vector<24x130xbf16>
    %c0_8 = arith.constant 0 : index
    %c0_9 = arith.constant 0 : index
    %16 = vector.load %arg5[%c0_8, %c0_9] : memref<8x24xbf16, #tpu.memory_space<vmem>>, vector<8x24xbf16>
    %cst = arith.constant dense<0.000000e+00> : vector<8x130xf32>
    %17 = tpu.matmul %16, %15, %cst {dimension_numbers = #tpu.dot_dimension_numbers<[1], [0], [0], [1], [0, 0, 1, 1], [], []>} : vector<8x24xbf16>, vector<24x130xbf16>, vector<8x130xf32> -> vector<8x130xf32>
    %c0_10 = arith.constant 0 : index
    %c0_11 = arith.constant 0 : index
    %18 = vector.load %arg6[%c0_10, %c0_11] : memref<8x1xf32, #tpu.memory_space<vmem>>, vector<8x1xf32>
    %19 = vector.broadcast %18 : vector<8x1xf32> to vector<8x130xf32>
    %20 = arith.mulf %17, %19 : vector<8x130xf32>
    %c0_12 = arith.constant 0 : index
    %c0_13 = arith.constant 0 : index
    %21 = vector.load %arg7[%c0_12, %c0_13] : memref<8x1xf32, #tpu.memory_space<vmem>>, vector<8x1xf32>
    %22 = vector.broadcast %21 : vector<8x1xf32> to vector<8x130xf32>
    %23 = arith.addf %20, %22 : vector<8x130xf32>
    %cst_14 = arith.constant 0.000000e+00 : f32
    %24 = vector.broadcast %cst_14 : f32 to vector<8x130xf32>
    %25 = arith.maximumf %23, %24 : vector<8x130xf32>
    %26 = tpu.iota {dimensions = array<i32: 1>} : vector<1x130xi32>
    %c128_i32 = arith.constant 128 : i32
    %27 = arith.muli %arg1, %c128_i32 : i32
    %c1_i32 = arith.constant 1 : i32
    %28 = arith.subi %27, %c1_i32 : i32
    %29 = vector.broadcast %28 : i32 to vector<1x130xi32>
    %30 = arith.addi %29, %26 : vector<1x130xi32>
    %c0_i32 = arith.constant 0 : i32
    %31 = vector.broadcast %c0_i32 : i32 to vector<1x130xi32>
    %32 = arith.cmpi sge, %30, %31 : vector<1x130xi32>
    %c16_i32 = arith.constant 16 : i32
    %33 = vector.broadcast %c16_i32 : i32 to vector<1x130xi32>
    %34 = arith.cmpi slt, %30, %33 : vector<1x130xi32>
    %35 = arith.andi %32, %34 : vector<1x130xi1>
    %cst_15 = arith.constant 0.000000e+00 : f32
    %36 = vector.shape_cast %35 : vector<1x130xi1> to vector<1x130xi1>
    %37 = vector.broadcast %36 : vector<1x130xi1> to vector<8x130xi1>
    %38 = vector.broadcast %cst_15 : f32 to vector<8x130xf32>
    %39 = arith.select %37, %25, %38 : vector<8x130xi1>, vector<8x130xf32>
    %40 = arith.truncf %39 : vector<8x130xf32> to vector<8x130xbf16>
    %41 = vector.extract_strided_slice %40 {offsets = [0, 0], sizes = [8, 128], strides = [1, 1]} : vector<8x130xbf16> to vector<8x128xbf16>
    %42 = vector.extract_strided_slice %40 {offsets = [0, 1], sizes = [8, 128], strides = [1, 1]} : vector<8x130xbf16> to vector<8x128xbf16>
    %43 = vector.extract_strided_slice %40 {offsets = [0, 2], sizes = [8, 128], strides = [1, 1]} : vector<8x130xbf16> to vector<8x128xbf16>
    %44 = tpu.concatenate %41, %42, %43 in 0 : vector<8x128xbf16>, vector<8x128xbf16>, vector<8x128xbf16> -> vector<24x128xbf16>
    %c0_16 = arith.constant 0 : index
    %c0_17 = arith.constant 0 : index
    %45 = vector.load %arg8[%c0_16, %c0_17] : memref<8x24xbf16, #tpu.memory_space<vmem>>, vector<8x24xbf16>
    %cst_18 = arith.constant dense<0.000000e+00> : vector<8x128xf32>
    %46 = tpu.matmul %45, %44, %cst_18 {dimension_numbers = #tpu.dot_dimension_numbers<[1], [0], [0], [1], [0, 0, 1, 1], [], []>} : vector<8x24xbf16>, vector<24x128xbf16>, vector<8x128xf32> -> vector<8x128xf32>
    %c0_19 = arith.constant 0 : index
    %c0_20 = arith.constant 0 : index
    %47 = vector.load %arg9[%c0_19, %c0_20] : memref<8x1xf32, #tpu.memory_space<vmem>>, vector<8x1xf32>
    %48 = vector.broadcast %47 : vector<8x1xf32> to vector<8x128xf32>
    %49 = arith.mulf %46, %48 : vector<8x128xf32>
    %c0_21 = arith.constant 0 : index
    %c0_22 = arith.constant 0 : index
    %50 = vector.load %arg10[%c0_21, %c0_22] : memref<8x1xf32, #tpu.memory_space<vmem>>, vector<8x1xf32>
    %51 = vector.broadcast %50 : vector<8x1xf32> to vector<8x128xf32>
    %52 = arith.addf %49, %51 : vector<8x128xf32>
    %53 = arith.addf %52, %1 : vector<8x128xf32>
    %cst_23 = arith.constant 0.000000e+00 : f32
    %54 = vector.broadcast %cst_23 : f32 to vector<8x128xf32>
    %55 = arith.maximumf %53, %54 : vector<8x128xf32>
    %c0_24 = arith.constant 0 : index
    %c0_25 = arith.constant 0 : index
    %c0_26 = arith.constant 0 : index
    %56 = vector.load %arg11[%c0_24, %c0_25, %c0_26] : memref<1x8x128xf32, #tpu.memory_space<vmem>>, vector<1x8x128xf32>
    %57 = vector.shape_cast %56 : vector<1x8x128xf32> to vector<8x128xf32>
    %58 = vector.shape_cast %55 : vector<8x128xf32> to vector<1x8x128xf32>
    tpu.vector_store %arg11[%c0_24, %c0_25, %c0_26], %58 {strides = array<i32>} : memref<1x8x128xf32, #tpu.memory_space<vmem>>, vector<1x8x128xf32>,
    return
  }
  func.func @transform_0(%arg0: i32, %arg1: i32) -> (i32, i32, i32) {
    %c1_i32 = arith.constant 1 : i32
    %0 = arith.addi %arg1, %c1_i32 : i32
    %c1_i32_0 = arith.constant 1 : i32
    %1 = arith.muli %0, %c1_i32_0 : i32
    %c1_i32_1 = arith.constant 1 : i32
    %2 = arith.subi %1, %c1_i32_1 : i32
    %c0_i32 = arith.constant 0 : i32
    %c0_i32_2 = arith.constant 0 : i32
    return %arg0, %c0_i32, %2 : i32, i32, i32
  }
  func.func @transform_1(%arg0: i32, %arg1: i32) -> (i32, i32, i32) {
    %c1_i32 = arith.constant 1 : i32
    %0 = arith.addi %arg1, %c1_i32 : i32
    %c0_i32 = arith.constant 0 : i32
    %c0_i32_0 = arith.constant 0 : i32
    return %arg0, %c0_i32, %0 : i32, i32, i32
  }
  func.func @transform_2(%arg0: i32, %arg1: i32) -> (i32, i32, i32) {
    %c2_i32 = arith.constant 2 : i32
    %0 = arith.addi %arg1, %c2_i32 : i32
    %c1_i32 = arith.constant 1 : i32
    %1 = arith.muli %0, %c1_i32 : i32
    %c0_i32 = arith.constant 0 : i32
    %c0_i32_0 = arith.constant 0 : i32
    return %arg0, %c0_i32, %1 : i32, i32, i32
  }
  func.func @transform_3(%arg0: i32, %arg1: i32) -> (i32, i32) {
    %c0_i32 = arith.constant 0 : i32
    %c0_i32_0 = arith.constant 0 : i32
    %c0_i32_1 = arith.constant 0 : i32
    return %c0_i32, %c0_i32_0 : i32, i32
  }
  func.func @transform_4(%arg0: i32, %arg1: i32) -> (i32, i32) {
    %c0_i32 = arith.constant 0 : i32
    %c0_i32_0 = arith.constant 0 : i32
    %c0_i32_1 = arith.constant 0 : i32
    return %c0_i32, %c0_i32_0 : i32, i32
  }
  func.func @transform_5(%arg0: i32, %arg1: i32) -> (i32, i32) {
    %c0_i32 = arith.constant 0 : i32
    %c0_i32_0 = arith.constant 0 : i32
    %c0_i32_1 = arith.constant 0 : i32
    return %c0_i32, %c0_i32_0 : i32, i32
  }
  func.func @transform_6(%arg0: i32, %arg1: i32) -> (i32, i32) {
    %c0_i32 = arith.constant 0 : i32
    %c0_i32_0 = arith.constant 0 : i32
    %c0_i32_1 = arith.constant 0 : i32
    return %c0_i32, %c0_i32_0 : i32, i32
  }
  func.func @transform_7(%arg0: i32, %arg1: i32) -> (i32, i32) {
    %c0_i32 = arith.constant 0 : i32
    %c0_i32_0 = arith.constant 0 : i32
    %c0_i32_1 = arith.constant 0 : i32
    return %c0_i32, %c0_i32_0 : i32, i32
  }
  func.func @transform_8(%arg0: i32, %arg1: i32) -> (i32, i32) {
    %c0_i32 = arith.constant 0 : i32
    %c0_i32_0 = arith.constant 0 : i32
    %c0_i32_1 = arith.constant 0 : i32
    return %c0_i32, %c0_i32_0 : i32, i32
  }
  func.func @transform_9(%arg0: i32, %arg1: i32) -> (i32, i32, i32) {
    %c0_i32 = arith.constant 0 : i32
    %c0_i32_0 = arith.constant 0 : i32
    return %arg0, %c0_i32, %arg1 : i32, i32, i32
  }
}

</mosaic_0001>

<llo_original>
// kernel: tpu_custom_call.1
$region0: #{tpu_custom_call.1}
  #allocation0 [shape = 'u32[]', space=smem, size = 0x4, offset = 0x4, fixed_abs, tag = 'smem constant byte address 0x4 - core index']
  #allocation1 [shape = 'u32[144,128]{1,0:T(1,128)}', space=vmem, size = 0x12000, scoped, tag = 'internal scratch']
  %s0 = inlined_call_operand.hbm [shape: f32[2,8,384], index: 0, kind: input, shape index: {}]
  %s1 = inlined_call_operand.hbm [shape: f32[2,8,384], index: 1, kind: input, shape index: {}]
  %s2 = inlined_call_operand.hbm [shape: f32[2,8,384], index: 2, kind: input, shape index: {}]
  %s3 = inlined_call_operand.vmem [shape: bf16[8,24], index: 3, kind: input, shape index: {}]
  %s4 = inlined_call_operand.vmem [shape: f32[8,1], index: 4, kind: input, shape index: {}]
  %s5 = inlined_call_operand.vmem [shape: f32[8,1], index: 5, kind: input, shape index: {}]
  %s6 = inlined_call_operand.vmem [shape: bf16[8,24], index: 6, kind: input, shape index: {}]
  %s7 = inlined_call_operand.vmem [shape: f32[8,1], index: 7, kind: input, shape index: {}]
  %s8 = inlined_call_operand.vmem [shape: f32[8,1], index: 8, kind: input, shape index: {}]
  %s9 = inlined_call_operand.hbm [shape: f32[2,8,128], index: 9, kind: output, shape index: {}]
  %s10 = sld [smem:[#allocation0]]
  $region81: #{tpu_custom_call.1} parent=0
    _
  %s12 = ssub.s32 1, %s10
  %s13 = scalar_select 0, %s12, %s10
  $region1: #{tpu_custom_call.1} parent=0
    #allocation2 [shape = 'u8[8192]{0}', space=vmem, size = 0x2000, scoped, tag = 'input window, operand 0']
    #allocation3 [shape = 's32[2]{0}', space=sflag, size = 0x8, scoped, tag = 'scoped memory for tpu_custom_call.1']
    #allocation4 [shape = 's32[2]{0}', space=sflag, size = 0x8, scoped, tag = 'scoped memory for tpu_custom_call.1']
    #allocation5 [shape = 'u8[8192]{0}', space=vmem, size = 0x2000, scoped, tag = 'input window, operand 1']
    #allocation6 [shape = 's32[2]{0}', space=sflag, size = 0x8, scoped, tag = 'scoped memory for tpu_custom_call.1']
    #allocation7 [shape = 'u8[8192]{0}', space=vmem, size = 0x2000, scoped, tag = 'input window, operand 2']
    #allocation8 [shape = 'u8[8192]{0}', space=vmem, size = 0x2000, scoped, tag = 'output window, operand 0']
    %14 = vsyncpa [#allocation3], 0
    %s15 = scalar_lea.sflag [#allocation3], 1
    %16 = vsyncpa %s15, 0
    %17 = vsyncpa [#allocation6], 0
    %s18 = scalar_lea.sflag [#allocation6], 1
    %19 = vsyncpa %s18, 0
    %20 = vsyncpa [#allocation4], 0
    %s21 = scalar_lea.sflag [#allocation4], 1
    %22 = vsyncpa %s21, 0
    loop: start=0, step=1, limit=4
    $region2: #{tpu_custom_call.1} parent=1 // loop_pre_header
      _
    $region3: #{tpu_custom_call.1} parent=1 // loop_header
      %s24 = sphi 0, %s28
      %p25 = scmp.ge.s32.totalorder %s24, 4
      %s31 = sphi 0, %s43
      %s32 = sphi 0, %s39
      %s33 = sphi 0, %s31
      %s34 = sphi 0, %s32
      %s35 = sphi 0, %s33
      %s36 = sphi 0, %s34
      %s48 = sphi 0, %s50
      %s51 = sphi 0, %s48
      %s52 = sphi 0, %s51
      %s68 = sphi 0, %s52
      %s78 = sphi 0, %s80
      %s81 = sphi 0, %s78
      %s82 = sphi 0, %s81
      %s98 = sphi 0, %s82
      %s108 = sphi 0, %s110
      %s111 = sphi 0, %s108
      %s112 = sphi 0, %s111
      %s128 = sphi 0, %s112
      %s132 = sphi 0, %s132
      %s134 = sphi 0, %s132
      %s135 = sphi 0, %s134
      %s149 = sphi 0, %s135
      %s153 = sphi 0, %s153
      %s155 = sphi 0, %s153
      %s156 = sphi 0, %s155
      %s170 = sphi 0, %s156
      %s174 = sphi 0, %s174
      %s176 = sphi 0, %s174
      %s177 = sphi 0, %s176
      %s191 = sphi 0, %s177
      %s195 = sphi 0, %s195
      %s197 = sphi 0, %s195
      %s198 = sphi 0, %s197
      %s212 = sphi 0, %s198
      %s216 = sphi 0, %s216
      %s218 = sphi 0, %s216
      %s219 = sphi 0, %s218
      %s233 = sphi 0, %s219
      %s237 = sphi 0, %s237
      %s239 = sphi 0, %s237
      %s240 = sphi 0, %s239
      %s254 = sphi 0, %s240
      %s262 = sphi 0, %s264
      %s265 = sphi 0, %s262
      %s266 = sphi 0, %s265
      %s282 = sphi 0, %s266
    $region4: #{tpu_custom_call.1} parent=1 // loop_header_branch
      %27 = sbr.rel (%p25) target = $region8
    $region5: #{tpu_custom_call.1} parent=1 // loop_body
      %s29 = ssub.s32 %s24, 1
      %s30 = ssub.s32 %s24, 2
      %s37 = sadd.s32 1, %s32
      %p38 = scmp.ge.s32.totalorder %s37, 1
      %s39 = scalar_select %p38, 0, %s37
      %s40 = sadd.s32 1, %s31
      %s41 = scalar_select %p38, %s40, %s31
      %p42 = scmp.ge.s32.totalorder %s41, 2
      %s43 = scalar_select %p42, 0, %s41
      %s44 = ssub.s32 %s31, %s43
      %s45 = ssub.s32 %s32, %s39
      %s46 = sor.u32 %s44, %s45
      %p47 = scmp.eq.s32.totalorder %s46, 0
      %s49 = sadd.s32 %s48, 1
      %s50 = scalar_select %p47, %s48, %s49
      %p53 = pneg %p47
      %p54 = scmp.eq.s32.totalorder %s24, 1
      %p55 = por %p53, %p54
      %p56 = scmp.ne.s32.totalorder %s48, %s51
      %p57 = scmp.eq.s32.totalorder %s24, 0
      %p58 = por %p56, %p57
      %p59 = scmp.ne.s32.totalorder %s48, %s51
      %p60 = scmp.eq.s32.totalorder %s29, 1
      %p61 = por %p59, %p60
      %p62 = scmp.ne.s32.totalorder %s51, %s52
      %p63 = scmp.eq.s32.totalorder %s29, 0
      %p64 = por %p62, %p63
      %p65 = scmp.ne.s32.totalorder %s51, %s52
      %p66 = scmp.eq.s32.totalorder %s30, 1
      %p67 = por %p65, %p66
      %p69 = scmp.ne.s32.totalorder %s52, %s68
      %p70 = scmp.eq.s32.totalorder %s30, 0
      %p71 = por %p69, %p70
      %s72 = sadd.s32 %s32, 1
      %s73 = sadd.s32 %s39, 1
      %s74 = ssub.s32 %s31, %s43
      %s75 = ssub.s32 %s72, %s73
      %s76 = sor.u32 %s74, %s75
      %p77 = scmp.eq.s32.totalorder %s76, 0
      %s79 = sadd.s32 %s78, 1
      %s80 = scalar_select %p77, %s78, %s79
      %p83 = pneg %p77
      %p84 = scmp.eq.s32.totalorder %s24, 1
      %p85 = por %p83, %p84
      %p86 = scmp.ne.s32.totalorder %s78, %s81
      %p87 = scmp.eq.s32.totalorder %s24, 0
      %p88 = por %p86, %p87
      %p89 = scmp.ne.s32.totalorder %s78, %s81
      %p90 = scmp.eq.s32.totalorder %s29, 1
      %p91 = por %p89, %p90
      %p92 = scmp.ne.s32.totalorder %s81, %s82
      %p93 = scmp.eq.s32.totalorder %s29, 0
      %p94 = por %p92, %p93
      %p95 = scmp.ne.s32.totalorder %s81, %s82
      %p96 = scmp.eq.s32.totalorder %s30, 1
      %p97 = por %p95, %p96
      %p99 = scmp.ne.s32.totalorder %s82, %s98
      %p100 = scmp.eq.s32.totalorder %s30, 0
      %p101 = por %p99, %p100
      %s102 = sadd.s32 %s32, 2
      %s103 = sadd.s32 %s39, 2
      %s104 = ssub.s32 %s31, %s43
      %s105 = ssub.s32 %s102, %s103
      %s106 = sor.u32 %s104, %s105
      %p107 = scmp.eq.s32.totalorder %s106, 0
      %s109 = sadd.s32 %s108, 1
      %s110 = scalar_select %p107, %s108, %s109
      %p113 = pneg %p107
      %p114 = scmp.eq.s32.totalorder %s24, 1
      %p115 = por %p113, %p114
      %p116 = scmp.ne.s32.totalorder %s108, %s111
      %p117 = scmp.eq.s32.totalorder %s24, 0
      %p118 = por %p116, %p117
      %p119 = scmp.ne.s32.totalorder %s108, %s111
      %p120 = scmp.eq.s32.totalorder %s29, 1
      %p121 = por %p119, %p120
      %p122 = scmp.ne.s32.totalorder %s111, %s112
      %p123 = scmp.eq.s32.totalorder %s29, 0
      %p124 = por %p122, %p123
      %p125 = scmp.ne.s32.totalorder %s111, %s112
      %p126 = scmp.eq.s32.totalorder %s30, 1
      %p127 = por %p125, %p126
      %p129 = scmp.ne.s32.totalorder %s112, %s128
      %p130 = scmp.eq.s32.totalorder %s30, 0
      %p131 = por %p129, %p130
      %s133 = sadd.s32 %s132, 1
      %p136 = scmp.eq.s32.totalorder %s24, 1
      %p137 = scmp.ne.s32.totalorder %s132, %s134
      %p138 = scmp.eq.s32.totalorder %s24, 0
      %p139 = por %p137, %p138
      %p140 = scmp.ne.s32.totalorder %s132, %s134
      %p141 = scmp.eq.s32.totalorder %s29, 1
      %p142 = por %p140, %p141
      %p143 = scmp.ne.s32.totalorder %s134, %s135
      %p144 = scmp.eq.s32.totalorder %s29, 0
      %p145 = por %p143, %p144
      %p146 = scmp.ne.s32.totalorder %s134, %s135
      %p147 = scmp.eq.s32.totalorder %s30, 1
      %p148 = por %p146, %p147
      %p150 = scmp.ne.s32.totalorder %s135, %s149
      %p151 = scmp.eq.s32.totalorder %s30, 0
      %p152 = por %p150, %p151
      %s154 = sadd.s32 %s153, 1
      %p157 = scmp.eq.s32.totalorder %s24, 1
      %p158 = scmp.ne.s32.totalorder %s153, %s155
      %p159 = scmp.eq.s32.totalorder %s24, 0
      %p160 = por %p158, %p159
      %p161 = scmp.ne.s32.totalorder %s153, %s155
      %p162 = scmp.eq.s32.totalorder %s29, 1
      %p163 = por %p161, %p162
      %p164 = scmp.ne.s32.totalorder %s155, %s156
      %p165 = scmp.eq.s32.totalorder %s29, 0
      %p166 = por %p164, %p165
      %p167 = scmp.ne.s32.totalorder %s155, %s156
      %p168 = scmp.eq.s32.totalorder %s30, 1
      %p169 = por %p167, %p168
      %p171 = scmp.ne.s32.totalorder %s156, %s170
      %p172 = scmp.eq.s32.totalorder %s30, 0
      %p173 = por %p171, %p172
      %s175 = sadd.s32 %s174, 1
      %p178 = scmp.eq.s32.totalorder %s24, 1
      %p179 = scmp.ne.s32.totalorder %s174, %s176
      %p180 = scmp.eq.s32.totalorder %s24, 0
      %p181 = por %p179, %p180
      %p182 = scmp.ne.s32.totalorder %s174, %s176
      %p183 = scmp.eq.s32.totalorder %s29, 1
      %p184 = por %p182, %p183
      %p185 = scmp.ne.s32.totalorder %s176, %s177
      %p186 = scmp.eq.s32.totalorder %s29, 0
      %p187 = por %p185, %p186
      %p188 = scmp.ne.s32.totalorder %s176, %s177
      %p189 = scmp.eq.s32.totalorder %s30, 1
      %p190 = por %p188, %p189
      %p192 = scmp.ne.s32.totalorder %s177, %s191
      %p193 = scmp.eq.s32.totalorder %s30, 0
      %p194 = por %p192, %p193
      %s196 = sadd.s32 %s195, 1
      %p199 = scmp.eq.s32.totalorder %s24, 1
      %p200 = scmp.ne.s32.totalorder %s195, %s197
      %p201 = scmp.eq.s32.totalorder %s24, 0
      %p202 = por %p200, %p201
      %p203 = scmp.ne.s32.totalorder %s195, %s197
      %p204 = scmp.eq.s32.totalorder %s29, 1
      %p205 = por %p203, %p204
      %p206 = scmp.ne.s32.totalorder %s197, %s198
      %p207 = scmp.eq.s32.totalorder %s29, 0
      %p208 = por %p206, %p207
      %p209 = scmp.ne.s32.totalorder %s197, %s198
      %p210 = scmp.eq.s32.totalorder %s30, 1
      %p211 = por %p209, %p210
      %p213 = scmp.ne.s32.totalorder %s198, %s212
      %p214 = scmp.eq.s32.totalorder %s30, 0
      %p215 = por %p213, %p214
      %s217 = sadd.s32 %s216, 1
      %p220 = scmp.eq.s32.totalorder %s24, 1
      %p221 = scmp.ne.s32.totalorder %s216, %s218
      %p222 = scmp.eq.s32.totalorder %s24, 0
      %p223 = por %p221, %p222
      %p224 = scmp.ne.s32.totalorder %s216, %s218
      %p225 = scmp.eq.s32.totalorder %s29, 1
      %p226 = por %p224, %p225
      %p227 = scmp.ne.s32.totalorder %s218, %s219
      %p228 = scmp.eq.s32.totalorder %s29, 0
      %p229 = por %p227, %p228
      %p230 = scmp.ne.s32.totalorder %s218, %s219
      %p231 = scmp.eq.s32.totalorder %s30, 1
      %p232 = por %p230, %p231
      %p234 = scmp.ne.s32.totalorder %s219, %s233
      %p235 = scmp.eq.s32.totalorder %s30, 0
      %p236 = por %p234, %p235
      %s238 = sadd.s32 %s237, 1
      %p241 = scmp.eq.s32.totalorder %s24, 1
      %p242 = scmp.ne.s32.totalorder %s237, %s239
      %p243 = scmp.eq.s32.totalorder %s24, 0
      %p244 = por %p242, %p243
      %p245 = scmp.ne.s32.totalorder %s237, %s239
      %p246 = scmp.eq.s32.totalorder %s29, 1
      %p247 = por %p245, %p246
      %p248 = scmp.ne.s32.totalorder %s239, %s240
      %p249 = scmp.eq.s32.totalorder %s29, 0
      %p250 = por %p248, %p249
      %p251 = scmp.ne.s32.totalorder %s239, %s240
      %p252 = scmp.eq.s32.totalorder %s30, 1
      %p253 = por %p251, %p252
      %p255 = scmp.ne.s32.totalorder %s240, %s254
      %p256 = scmp.eq.s32.totalorder %s30, 0
      %p257 = por %p255, %p256
      %s258 = ssub.s32 %s31, %s43
      %s259 = ssub.s32 %s32, %s39
      %s260 = sor.u32 %s258, %s259
      %p261 = scmp.eq.s32.totalorder %s260, 0
      %s263 = sadd.s32 %s262, 1
      %s264 = scalar_select %p261, %s262, %s263
      %p267 = pneg %p261
      %p268 = scmp.eq.s32.totalorder %s24, 1
      %p269 = por %p267, %p268
      %p270 = scmp.ne.s32.totalorder %s262, %s265
      %p271 = scmp.eq.s32.totalorder %s24, 0
      %p272 = por %p270, %p271
      %p273 = scmp.ne.s32.totalorder %s262, %s265
      %p274 = scmp.eq.s32.totalorder %s29, 1
      %p275 = por %p273, %p274
      %p276 = scmp.ne.s32.totalorder %s265, %s266
      %p277 = scmp.eq.s32.totalorder %s29, 0
      %p278 = por %p276, %p277
      %p279 = scmp.ne.s32.totalorder %s265, %s266
      %p280 = scmp.eq.s32.totalorder %s30, 1
      %p281 = por %p279, %p280
      %p283 = scmp.ne.s32.totalorder %s266, %s282
      %p284 = scmp.eq.s32.totalorder %s30, 0
      %p285 = por %p283, %p284
      %p286 = scmp.le.s32.totalorder 1, %s24
      %p287 = scmp.lt.s32.totalorder %s24, 3
      %p288 = pnand %p286, %p287
      %p289 = pneg %p288
      // Predicated region
      $region9: #{tpu_custom_call.1} parent=5 // pred_check
        _
      $region10: #{tpu_custom_call.1} parent=5 // pred_check_branch
        %291 = sbr.rel (%p288) target = $region12
      $region11: #{tpu_custom_call.1} parent=5 // pred_region
        %s292 = ssub.s32 %s24, 1
        // Predicated region
        $region13: #{tpu_custom_call.1} parent=11 // pred_check
          %p293 = pneg %p145
        $region14: #{tpu_custom_call.1} parent=11 // pred_check_branch
          %295 = sbr.rel (%p293) target = $region16
        $region15: #{tpu_custom_call.1} parent=11 // pred_region
          _
        $region16: #{tpu_custom_call.1} parent=11 // pred_fallthru
          _
        // Predicated region
        $region17: #{tpu_custom_call.1} parent=11 // pred_check
          %p296 = pneg %p166
        $region18: #{tpu_custom_call.1} parent=11 // pred_check_branch
          %298 = sbr.rel (%p296) target = $region20
        $region19: #{tpu_custom_call.1} parent=11 // pred_region
          _
        $region20: #{tpu_custom_call.1} parent=11 // pred_fallthru
          _
        // Predicated region
        $region21: #{tpu_custom_call.1} parent=11 // pred_check
          %p299 = pneg %p187
        $region22: #{tpu_custom_call.1} parent=11 // pred_check_branch
          %301 = sbr.rel (%p299) target = $region24
        $region23: #{tpu_custom_call.1} parent=11 // pred_region
          _
        $region24: #{tpu_custom_call.1} parent=11 // pred_fallthru
          _
        // Predicated region
        $region25: #{tpu_custom_call.1} parent=11 // pred_check
          %p302 = pneg %p208
        $region26: #{tpu_custom_call.1} parent=11 // pred_check_branch
          %304 = sbr.rel (%p302) target = $region28
        $region27: #{tpu_custom_call.1} parent=11 // pred_region
          _
        $region28: #{tpu_custom_call.1} parent=11 // pred_fallthru
          _
        // Predicated region
        $region29: #{tpu_custom_call.1} parent=11 // pred_check
          %p305 = pneg %p229
        $region30: #{tpu_custom_call.1} parent=11 // pred_check_branch
          %307 = sbr.rel (%p305) target = $region32
        $region31: #{tpu_custom_call.1} parent=11 // pred_region
          _
        $region32: #{tpu_custom_call.1} parent=11 // pred_fallthru
          _
        // Predicated region
        $region33: #{tpu_custom_call.1} parent=11 // pred_check
          %p308 = pneg %p250
        $region34: #{tpu_custom_call.1} parent=11 // pred_check_branch
          %310 = sbr.rel (%p308) target = $region36
        $region35: #{tpu_custom_call.1} parent=11 // pred_region
          _
        $region36: #{tpu_custom_call.1} parent=11 // pred_fallthru
          _
      $region12: #{tpu_custom_call.1} parent=5 // pred_fallthru
        _
      %p311 = scmp.lt.s32.totalorder %s24, 2
      // Predicated region
      $region37: #{tpu_custom_call.1} parent=5 // pred_check
        %p312 = pneg %p311
      $region38: #{tpu_custom_call.1} parent=5 // pred_check_branch
        %314 = sbr.rel (%p312) target = $region40
      $region39: #{tpu_custom_call.1} parent=5 // pred_region
        // Predicated region
        $region41: #{tpu_custom_call.1} parent=39 // pred_check
          %p315 = pneg %p58
        $region42: #{tpu_custom_call.1} parent=39 // pred_check_branch
          %317 = sbr.rel (%p315) target = $region44
        $region43: #{tpu_custom_call.1} parent=39 // pred_region
          %s318 = sand.u32 %s48, 1
          %s319 = scalar_lea.sflag [#allocation3], %s318
          %s320 = sand.u32 %s48, 1
          %s321 = smul.addr %s320, 8
          %s322 = scalar_lea.vmem [#allocation2], %s321
          %s324 = ssub.s32 128, 128
          %325 = vsyncadd %s319, %s324
          %s326 = smul.addr %s31, 3
          %s327 = sadd.s32 %s32, %s326
          %s328 = smul.addr %s327, 128
          %s329 = scalar_lea.hbm %s0, %s328
          %s331 = sshll.u32 %s322, 4
          %s332 = int_to_ptr.vmem [resolvable:$true] %s331
          %334 = dma.hbm_to_vmem [thread:$0]  %s329, 128, %s332, %s319
        $region44: #{tpu_custom_call.1} parent=39 // pred_fallthru
          _
        // Predicated region
        $region45: #{tpu_custom_call.1} parent=39 // pred_check
          %p335 = pneg %p88
        $region46: #{tpu_custom_call.1} parent=39 // pred_check_branch
          %337 = sbr.rel (%p335) target = $region48
        $region47: #{tpu_custom_call.1} parent=39 // pred_region
          %s338 = sand.u32 %s24, 1
          %s339 = scalar_lea.sflag [#allocation6], %s338
          %s340 = sand.u32 %s78, 1
          %s341 = smul.addr %s340, 8
          %s342 = scalar_lea.vmem [#allocation5], %s341
          %s343 = sadd.s32 %s32, 1
          %s345 = ssub.s32 128, 128
          %346 = vsyncadd %s339, %s345
          %s347 = smul.addr %s31, 3
          %s348 = sadd.s32 %s343, %s347
          %s349 = smul.addr %s348, 128
          %s350 = scalar_lea.hbm %s1, %s349
          %s352 = sshll.u32 %s342, 4
          %s353 = int_to_ptr.vmem [resolvable:$true] %s352
          %355 = dma.hbm_to_vmem [thread:$0]  %s350, 128, %s353, %s339
        $region48: #{tpu_custom_call.1} parent=39 // pred_fallthru
          _
        // Predicated region
        $region49: #{tpu_custom_call.1} parent=39 // pred_check
          %p356 = pneg %p118
        $region50: #{tpu_custom_call.1} parent=39 // pred_check_branch
          %358 = sbr.rel (%p356) target = $region52
        $region51: #{tpu_custom_call.1} parent=39 // pred_region
          %s359 = sand.u32 %s24, 1
          %s360 = scalar_lea.sflag [#allocation6], %s359
          %s361 = sand.u32 %s108, 1
          %s362 = smul.addr %s361, 8
          %s363 = scalar_lea.vmem [#allocation7], %s362
          %s364 = sadd.s32 %s32, 2
          %s366 = ssub.s32 128, 128
          %367 = vsyncadd %s360, %s366
          %s368 = smul.addr %s31, 3
          %s369 = sadd.s32 %s364, %s368
          %s370 = smul.addr %s369, 128
          %s371 = scalar_lea.hbm %s2, %s370
          %s373 = sshll.u32 %s363, 4
          %s374 = int_to_ptr.vmem [resolvable:$true] %s373
          %376 = dma.hbm_to_vmem [thread:$0]  %s371, 128, %s374, %s360
        $region52: #{tpu_custom_call.1} parent=39 // pred_fallthru
          _
      $region40: #{tpu_custom_call.1} parent=5 // pred_fallthru
        _
      %p377 = scmp.le.s32.totalorder 1, %s24
      %p378 = scmp.lt.s32.totalorder %s24, 3
      %p379 = pnand %p377, %p378
      %p380 = pneg %p379
      // Predicated region
      $region53: #{tpu_custom_call.1} parent=5 // pred_check
        _
      $region54: #{tpu_custom_call.1} parent=5 // pred_check_branch
        %382 = sbr.rel (%p379) target = $region56
      $region55: #{tpu_custom_call.1} parent=5 // pred_region
        %s383 = ssub.s32 %s24, 1
        %s384 = sand.u32 %s51, 1
        %s385 = scalar_lea.sflag [#allocation3], %s384
        %s386 = sand.u32 %s51, 1
        %s387 = smul.addr %s386, 8
        %s388 = scalar_lea.vmem [#allocation2], %s387
        // Predicated region
        $region57: #{tpu_custom_call.1} parent=55 // pred_check
          %p389 = pneg %p64
        $region58: #{tpu_custom_call.1} parent=55 // pred_check_branch
          %391 = sbr.rel (%p389) target = $region60
        $region59: #{tpu_custom_call.1} parent=55 // pred_region
          %392 = dma.done %s385, 128
        $region60: #{tpu_custom_call.1} parent=55 // pred_fallthru
          _
        %s393 = sand.u32 %s29, 1
        %s394 = scalar_lea.sflag [#allocation6], %s393
        %s395 = sand.u32 %s81, 1
        %s396 = smul.addr %s395, 8
        %s397 = scalar_lea.vmem [#allocation5], %s396
        // Predicated region
        $region61: #{tpu_custom_call.1} parent=55 // pred_check
          %p398 = pneg %p94
        $region62: #{tpu_custom_call.1} parent=55 // pred_check_branch
          %400 = sbr.rel (%p398) target = $region64
        $region63: #{tpu_custom_call.1} parent=55 // pred_region
          %401 = dma.done %s394, 128
        $region64: #{tpu_custom_call.1} parent=55 // pred_fallthru
          _
        %s402 = sand.u32 %s29, 1
        %s403 = scalar_lea.sflag [#allocation6], %s402
        %s404 = sand.u32 %s111, 1
        %s405 = smul.addr %s404, 8
        %s406 = scalar_lea.vmem [#allocation7], %s405
        // Predicated region
        $region65: #{tpu_custom_call.1} parent=55 // pred_check
          %p407 = pneg %p124
        $region66: #{tpu_custom_call.1} parent=55 // pred_check_branch
          %409 = sbr.rel (%p407) target = $region68
        $region67: #{tpu_custom_call.1} parent=55 // pred_region
          %410 = dma.done %s403, 128
        $region68: #{tpu_custom_call.1} parent=55 // pred_fallthru
          _
        %s411 = sand.u32 %s51, 1
        %s412 = scalar_lea.sflag [#allocation3], %s411
        %s413 = sand.u32 %s51, 1
        %s414 = smul.addr %s413, 8
        %s415 = scalar_lea.vmem [#allocation2], %s414
        %p416 = pneg %p64
        %p417 = pneg %p61
        %s418 = sand.u32 %s29, 1
        %s419 = scalar_lea.sflag [#allocation6], %s418
        %s420 = sand.u32 %s81, 1
        %s421 = smul.addr %s420, 8
        %s422 = scalar_lea.vmem [#allocation5], %s421
        %p423 = pneg %p94
        %p424 = pneg %p91
        %s425 = sand.u32 %s29, 1
        %s426 = scalar_lea.sflag [#allocation6], %s425
        %s427 = sand.u32 %s111, 1
        %s428 = smul.addr %s427, 8
        %s429 = scalar_lea.vmem [#allocation7], %s428
        %p430 = pneg %p124
        %p431 = pneg %p121
        %p432 = pneg %p145
        %p433 = pneg %p142
        %p434 = pneg %p166
        %p435 = pneg %p163
        %p436 = pneg %p187
        %p437 = pneg %p184
        %p438 = pneg %p208
        %p439 = pneg %p205
        %p440 = pneg %p229
        %p441 = pneg %p226
        %p442 = pneg %p250
        %p443 = pneg %p247
        %p444 = pneg %p278
        %p445 = pneg %p275
        %s446 = sand.u32 %s265, 1
        %s447 = scalar_lea.sflag [#allocation4], %s446
        %s448 = sand.u32 %s265, 1
        %s449 = smul.addr %s448, 8
        %s450 = scalar_lea.vmem [#allocation8], %s449
        %s451 = sadd.s32 %s34, 1
        %s452 = sadd.s32 %s34, 2
        %v454 = vld [vmem:[%s397] sm:$0xff]
        %v455 = vpack.c.bf16 %v454, %v454
        %v456 = vld [vmem:[%s388] sm:$0xff]
        %v457 = vpack.c.bf16 %v456, %v456
        %v458 = vld [vmem:[%s406] sm:$0xff]
        %v459 = vpack.c.bf16 %v458, %v458
        %461 = vrot.lane.b32.xlu0 %v457, 2
        %v462 = vpop.permute.xlu0 %461
        %464 = vrot.lane.b32.xlu0 %v455, 2
        %v465 = vpop.permute.xlu0 %464
        %467 = vrot.lane.b32.xlu0 %v459, 2
        %v468 = vpop.permute.xlu0 %467
        %vm469 = vcmask 15360
        %v472 = vsel %vm469, %v462, %v465
        %v474 = vsel %vm469, %v465, %v468
        %v477 = vrot.slane %v472, 4
        %v478 = vrot.slane %v474, 4
        %479 = vrot.lane.b32.xlu0 %v477, 127
        %v480 = vpop.permute.xlu0 %479
        %481 = vrot.lane.b32.xlu0 %v478, 127
        %v482 = vpop.permute.xlu0 %481
        %vm483 = vcmask 1039360
        %v484 = vsel %vm483, %v480, %v482
        %485 = vrot.lane.b32.xlu0 %v472, 126
        %v486 = vpop.permute.xlu0 %485
        %487 = vrot.lane.b32.xlu0 %v474, 126
        %v488 = vpop.permute.xlu0 %487
        %vm489 = vcmask 1031168
        %v490 = vsel %vm489, %v486, %v488
        %vm491 = vcmask 1043456
        %v493 = vsel %vm491, %v472, %v484
        %v496 = vsel %vm491, %v474, %v482
        %v498 = vld [vmem:[%s3] sm:$0xf]
        %vm499 = vcmask 195584
        %v501 = vsel %vm499, %v498, 0
        %v504 = vsel %vm491, %v490, 0
        %v507 = vsel %vm491, %v488, 0
        %509 = vmatprep.subr.bf16.mxu0 %v496
        %510 = vmatpush1.bf16.msra.mxu0 %v493
        %511 = vmatprep.subr.bf16.mxu0 %v507
        %512 = vmatpush1.bf16.msra.mxu0 %v504
        %513 = vmatprep.subr.bf16.mxu0 0
        %514 = vmatpush1.bf16.msra.mxu0 0
        %515 = vmatprep.subr.bf16.mxu0 0
        %516 = vmatpush1.bf16.msra.mxu0 0
        %517 = vmatprep.subr.bf16.mxu0 0
        %518 = vmatpush1.bf16.msra.mxu0 0
        %519 = vmatprep.subr.bf16.mxu0 0
        %520 = vmatpush1.bf16.msra.mxu0 0
        %521 = vmatprep.subr.bf16.mxu0 0
        %522 = vmatpush1.bf16.msra.mxu0 0
        %523 = vmatprep.subr.bf16.mxu0 0
        %524 = vmatpush1.bf16.msra.mxu0 0
        %525 = vmatprep.subr.bf16.mxu0 0
        %526 = vmatpush1.bf16.msra.mxu0 0
        %527 = vmatprep.subr.bf16.mxu0 0
        %528 = vmatpush1.bf16.msra.mxu0 0
        %529 = vmatprep.subr.bf16.mxu0 0
        %530 = vmatpush1.bf16.msra.mxu0 0
        %531 = vmatprep.subr.bf16.mxu0 0
        %532 = vmatpush1.bf16.msra.mxu0 0
        %533 = vmatprep.subr.bf16.mxu0 0
        %534 = vmatpush1.bf16.msra.mxu0 0
        %535 = vmatprep.subr.bf16.mxu0 0
        %536 = vmatpush1.bf16.msra.mxu0 0
        %537 = vmatprep.subr.bf16.mxu0 0
        %538 = vmatpush1.bf16.msra.mxu0 0
        %539 = vmatprep.subr.bf16.mxu0 0
        %540 = vmatpush1.bf16.msra.mxu0 0
        %541 = vmatprep.mubr.bf16.mxu0 0
        %542 = vmatmul.mubr.bf16.gmra.mrb[0].mxu0 %v501
        %v543 = vpop.f32.mrb[0].mxu0
        %v544 = vadd.f32 0.0, %v543
        %v545 = vpop.f32.mrb[0].mxu0
        %v546 = vadd.f32 0.0, %v545
        %v547 = vpop.f32.mrb[0].mxu0
        %v548 = vpop.f32.mrb[0].mxu0
        %549 = vdwg.mxu0
        %v550 = vld [vmem:[%s4] sm:$0xff]
        %552 = vset.pattern.permute.xlu0 0
        %553 = vperm.xlu0 %552, %v550
        %v554 = vpop.permute.xlu0 %553
        %v556 = vmul.f32 %v544, %v554
        %v557 = vmul.f32 %v546, %v554
        %v558 = vld [vmem:[%s5] sm:$0xff]
        %560 = vset.pattern.permute.xlu0 0
        %561 = vperm.xlu0 %560, %v558
        %v562 = vpop.permute.xlu0 %561
        %v564 = vadd.f32 %v556, %v562
        %v565 = vadd.f32 %v557, %v562
        %v566 = vmax.f32 %v564, 0.0
        %v567 = vmax.f32 %v565, 0.0
        %v568 = vlaneseq
        %v569 = vand.u32 %v568, 127
        %v570 = vadd.s32 %v569, 128
        %s571 = smul.u32 %s34, 128
        %s572 = ssub.s32 %s571, 1
        %v573 = vstv %s572
        %v574 = vadd.s32 %v573, %v569
        %v575 = vadd.s32 %v573, %v570
        %vm576 = vcmp.ge.s32.totalorder %v574, 0
        %vm577 = vcmp.ge.s32.totalorder %v575, 0
        %vm578 = vcmp.lt.s32.totalorder %v574, 16
        %vm579 = vcmp.lt.s32.totalorder %v575, 16
        %vm580 = vmand %vm576, %vm578
        %vm581 = vmand %vm577, %vm579
        %v582 = vsel %vm580, 1, 0
        %v583 = vsel %vm581, 1, 0
        %vm584 = vcmp.eq.s32.totalorder %v582, 1
        %vm585 = vcmp.eq.s32.totalorder %v583, 1
        %v586 = vsel %vm584, %v566, 0.0
        %v587 = vsel %vm585, %v567, 0.0
        %v588 = vpack.c.bf16 %v586, %v586
        %v589 = vpack.c.bf16 %v587, %v587
        %v592 = vrot.slane %v588, 4
        %v593 = vrot.slane %v589, 4
        %594 = vrot.lane.b32.xlu0 %v592, 127
        %v595 = vpop.permute.xlu0 %594
        %596 = vrot.lane.b32.xlu0 %v593, 127
        %v597 = vpop.permute.xlu0 %596
        %v598 = vsel %vm483, %v595, %v597
        %599 = vrot.lane.b32.xlu0 %v588, 126
        %v600 = vpop.permute.xlu0 %599
        %601 = vrot.lane.b32.xlu0 %v589, 126
        %v602 = vpop.permute.xlu0 %601
        %v603 = vsel %vm489, %v600, %v602
        %v606 = vsel %vm491, %v588, %v598
        %v608 = vld [vmem:[%s6] sm:$0xf]
        %v610 = vsel %vm499, %v608, 0
        %v613 = vsel %vm491, %v603, 0
        %615 = vmatprep.subr.bf16.mxu0 0
        %616 = vmatpush1.bf16.msra.mxu0 %v606
        %617 = vmatprep.subr.bf16.mxu0 0
        %618 = vmatpush1.bf16.msra.mxu0 %v613
        %619 = vmatprep.subr.bf16.mxu0 0
        %620 = vmatpush1.bf16.msra.mxu0 0
        %621 = vmatprep.subr.bf16.mxu0 0
        %622 = vmatpush1.bf16.msra.mxu0 0
        %623 = vmatprep.subr.bf16.mxu0 0
        %624 = vmatpush1.bf16.msra.mxu0 0
        %625 = vmatprep.subr.bf16.mxu0 0
        %626 = vmatpush1.bf16.msra.mxu0 0
        %627 = vmatprep.subr.bf16.mxu0 0
        %628 = vmatpush1.bf16.msra.mxu0 0
        %629 = vmatprep.subr.bf16.mxu0 0
        %630 = vmatpush1.bf16.msra.mxu0 0
        %631 = vmatprep.subr.bf16.mxu0 0
        %632 = vmatpush1.bf16.msra.mxu0 0
        %633 = vmatprep.subr.bf16.mxu0 0
        %634 = vmatpush1.bf16.msra.mxu0 0
        %635 = vmatprep.subr.bf16.mxu0 0
        %636 = vmatpush1.bf16.msra.mxu0 0
        %637 = vmatprep.subr.bf16.mxu0 0
        %638 = vmatpush1.bf16.msra.mxu0 0
        %639 = vmatprep.subr.bf16.mxu0 0
        %640 = vmatpush1.bf16.msra.mxu0 0
        %641 = vmatprep.subr.bf16.mxu0 0
        %642 = vmatpush1.bf16.msra.mxu0 0
        %643 = vmatprep.subr.bf16.mxu0 0
        %644 = vmatpush1.bf16.msra.mxu0 0
        %645 = vmatprep.subr.bf16.mxu0 0
        %646 = vmatpush1.bf16.msra.mxu0 0
        %647 = vmatprep.mubr.bf16.mxu0 0
        %648 = vmatmul.mubr.bf16.gmra.mrb[0].mxu0 %v610
        %v649 = vpop.f32.mrb[0].mxu0
        %v650 = vadd.f32 0.0, %v649
        %v651 = vpop.f32.mrb[0].mxu0
        %v652 = vpop.f32.mrb[0].mxu0
        %v653 = vpop.f32.mrb[0].mxu0
        %654 = vdwg.mxu0
        %v655 = vld [vmem:[%s7] sm:$0xff]
        %657 = vset.pattern.permute.xlu0 0
        %658 = vperm.xlu0 %657, %v655
        %v659 = vpop.permute.xlu0 %658
        %v661 = vmul.f32 %v650, %v659
        %v662 = vld [vmem:[%s8] sm:$0xff]
        %664 = vset.pattern.permute.xlu0 0
        %665 = vperm.xlu0 %664, %v662
        %v666 = vpop.permute.xlu0 %665
        %v668 = vadd.f32 %v661, %v666
        %v669 = vadd.f32 %v668, %v454
        %v670 = vmax.f32 %v669, 0.0
        %671 = vst [vmem:[%s450] sm:$0xff] %v670
        %s672 = sand.u32 %s265, 1
        %s673 = scalar_lea.sflag [#allocation4], %s672
        %s674 = sand.u32 %s265, 1
        %s675 = smul.addr %s674, 8
        %s676 = scalar_lea.vmem [#allocation8], %s675
        // Predicated region
        $region69: #{tpu_custom_call.1} parent=55 // pred_check
          %p677 = pneg %p275
        $region70: #{tpu_custom_call.1} parent=55 // pred_check_branch
          %679 = sbr.rel (%p677) target = $region72
        $region71: #{tpu_custom_call.1} parent=55 // pred_region
          %s681 = ssub.s32 128, 128
          %682 = vsyncadd %s673, %s681
          %s683 = sadd.s32 %s34, %s33
          %s684 = smul.addr %s683, 128
          %s685 = scalar_lea.hbm %s9, %s684
          %s687 = sshll.u32 %s676, 4
          %s688 = int_to_ptr.vmem [resolvable:$true] %s687
          %690 = dma.vmem_to_hbm [thread:$0]  %s688, 128, %s685, %s673
        $region72: #{tpu_custom_call.1} parent=55 // pred_fallthru
          _
      $region56: #{tpu_custom_call.1} parent=5 // pred_fallthru
        _
      %p691 = scmp.le.s32.totalorder 2, %s24
      // Predicated region
      $region73: #{tpu_custom_call.1} parent=5 // pred_check
        %p692 = pneg %p691
      $region74: #{tpu_custom_call.1} parent=5 // pred_check_branch
        %694 = sbr.rel (%p692) target = $region76
      $region75: #{tpu_custom_call.1} parent=5 // pred_region
        %s695 = ssub.s32 %s24, 2
        // Predicated region
        $region77: #{tpu_custom_call.1} parent=75 // pred_check
          %p696 = pneg %p281
        $region78: #{tpu_custom_call.1} parent=75 // pred_check_branch
          %698 = sbr.rel (%p696) target = $region80
        $region79: #{tpu_custom_call.1} parent=75 // pred_region
          %s699 = sand.u32 %s266, 1
          %s700 = scalar_lea.sflag [#allocation4], %s699
          %s701 = sand.u32 %s266, 1
          %s702 = smul.addr %s701, 8
          %s703 = scalar_lea.vmem [#allocation8], %s702
          %704 = dma.done %s700, 128
        $region80: #{tpu_custom_call.1} parent=75 // pred_fallthru
          _
      $region76: #{tpu_custom_call.1} parent=5 // pred_fallthru
        _
    $region6: #{tpu_custom_call.1} parent=1 // loop_footer
      %s28 = sadd.s32 1, %s24
    $region7: #{tpu_custom_call.1} parent=1 // loop_footer_branch
      %23 = sbr.rel target = $region3
    $region8: #{tpu_custom_call.1} parent=1 // loop_exit
      _
    %705 = vsyncpa [#allocation3], 1
    %s706 = scalar_lea.sflag [#allocation3], 1
    %707 = vsyncpa %s706, 1
    %708 = vsyncpa [#allocation6], 1
    %s709 = scalar_lea.sflag [#allocation6], 1
    %710 = vsyncpa %s709, 1
    %711 = vsyncpa [#allocation4], 1
    %s712 = scalar_lea.sflag [#allocation4], 1
    %713 = vsyncpa %s712, 1

</llo_original>
